<compile_context>
chip_gen: v6e
topology: v6e:2x2x1
jax: 0.10.0
libtpu: 0.0.40
codegen_flags: <defaults>
</compile_context>

<pallas_src>
import functools

import jax
import jax.numpy as jnp
from jax.experimental import pallas as pl
from jax.experimental.pallas import tpu as pltpu


def _round_up(x, m):
    return ((x + m - 1) // m) * m


def _residual_linear_kernel(x_ref, w_ref, b_ref, o_ref):
    """o = (x @ W + b) + x on the current (TILE_M, D_pad) tile.

    x_ref : (TILE_M, D_pad)  input dtype (e.g. f32)
    w_ref : (D_pad, D_pad)   bf16, resident across the whole grid
    b_ref : (1, D_pad)       f32, resident
    o_ref : (TILE_M, D_pad)  output dtype == input dtype
    """
    x = x_ref[...]
    # bf16 operands -> MXU fast path; accumulate in f32.
    y = jnp.dot(x.astype(jnp.bfloat16), w_ref[...],
                preferred_element_type=jnp.float32)
    y = y + b_ref[...]                       # (1, D_pad) lane-aligned broadcast
    # Residual add in f32, then cast once on store.
    o_ref[...] = (y + x.astype(jnp.float32)).astype(o_ref.dtype)


def _choose_tile_m(m_rows, d_pad, io_bytes, w_bytes, budget_bytes=32 * 1024 * 1024):
    """Largest row tile such that double-buffered x/out blocks + resident W fit."""
    avail = budget_bytes - w_bytes - d_pad * 4          # W + bias resident
    per_row = 2 * d_pad * io_bytes * 2                  # 2 bufs x (x block + out block)
    tile = max(8, min(1024, avail // per_row if avail > 0 else 8))
    tile = max(8, (tile // 8) * 8)                      # sublane multiple
    tile = min(tile, _round_up(m_rows, 8))              # don't exceed the problem
    return int(tile)


@functools.partial(jax.jit, static_argnames=())
def residual_linear(x, w, b):
    """Residual(fn=Linear(D, D))(x) == x @ w + b + x.

    x: (B, N, D), w: (D, D), b: (D,)
    """
    B, N, D = x.shape
    M = B * N
    D_pad = _round_up(D, 128)                           # lane-dense output
    io_bytes = jnp.dtype(x.dtype).itemsize

    # Glue reshapes / pads stay in plain JAX.
    x2 = x.reshape(M, D)
    w_p, b_p = w, b
    if D_pad != D:
        x2 = jnp.pad(x2, ((0, 0), (0, D_pad - D)))
        w_p = jnp.pad(w, ((0, D_pad - D), (0, D_pad - D)))
        b_p = jnp.pad(b, (0, D_pad - D))

    w_bf = w_p.astype(jnp.bfloat16)                     # bf16 operand for the MXU
    b2 = b_p.astype(jnp.float32).reshape(1, D_pad)

    w_bytes = D_pad * D_pad * 2
    TILE_M = _choose_tile_m(M, D_pad, io_bytes, w_bytes)

    # Pad rows so TILE_M divides M exactly (padded rows are dropped on slice-out).
    M_pad = _round_up(M, TILE_M)
    if M_pad != M:
        x2 = jnp.pad(x2, ((0, M_pad - M), (0, 0)))

    grid = (M_pad // TILE_M,)

    cost = pl.CostEstimate(
        flops=2 * M * D * D,
        transcendentals=0,
        bytes_accessed=io_bytes * (2 * M * D) + w_bytes + 4 * D,
    )

    out2 = pl.pallas_call(
        _residual_linear_kernel,
        out_shape=jax.ShapeDtypeStruct((M_pad, D_pad), x.dtype),
        grid_spec=pltpu.PrefetchScalarGridSpec(
            num_scalar_prefetch=0,
            grid=grid,
            in_specs=[
                pl.BlockSpec((TILE_M, D_pad), lambda i: (i, 0)),   # x  (pipelined)
                pl.BlockSpec((D_pad, D_pad), lambda i: (0, 0)),    # W  (resident)
                pl.BlockSpec((1, D_pad), lambda i: (0, 0)),        # b  (resident)
            ],
            out_specs=pl.BlockSpec((TILE_M, D_pad), lambda i: (i, 0)),
        ),
        compiler_params=pltpu.CompilerParams(
            dimension_semantics=("parallel",),          # megacore on v7x
            vmem_limit_bytes=48 * 1024 * 1024,          # < 64 MiB (v7x physical)
        ),
        cost_estimate=cost,
    )(x2, w_bf, b2)

    return out2[:M, :D].reshape(B, N, D)


if __name__ == "__main__":
    # Small shapes consistent with a perceiver residual block.
    B, N, D = 2, 8, 32

    key = jax.random.PRNGKey(0)
    kx, kw, kb = jax.random.split(key, 3)

    x = jax.random.normal(kx, (B, N, D), dtype=jnp.float32)
    # Deterministic parameter init (Linear(D, D)).
    w = jax.random.normal(kw, (D, D), dtype=jnp.float32) * (1.0 / (D ** 0.5))
    b = jax.random.normal(kb, (D,), dtype=jnp.float32) * 0.02

    out = residual_linear(x, w, b)
    out = jax.block_until_ready(out)

    assert out.shape == x.shape and out.dtype == x.dtype

    # Tight check vs a reference using the same bf16-operand / f32-accumulate matmul.
    ref_bf16 = (
        jnp.einsum(
            "bnd,de->bne",
            x.astype(jnp.bfloat16),
            w.astype(jnp.bfloat16),
            preferred_element_type=jnp.float32,
        )
        + b
        + x
    ).astype(x.dtype)
    assert jnp.allclose(out, ref_bf16, atol=1e-3, rtol=1e-3), "mismatch vs bf16 reference"

    # Loose check vs the full-f32 PyTorch-equivalent semantics (fn(x) + x).
    ref_f32 = jnp.einsum("bnd,de->bne", x, w) + b + x
    assert jnp.allclose(out, ref_f32, atol=3e-2, rtol=3e-2), "mismatch vs f32 reference"

    print("KERNEL_OK")
</pallas_src>

<mosaic_0001>
module attributes {stable_mosaic.version = 11 : i64} {
  func.func @_residual_linear_kernel(%arg0: i32, %arg1: memref<16x128xf32, #tpu.memory_space<vmem>>, %arg2: memref<128x128xbf16, #tpu.memory_space<vmem>>, %arg3: memref<1x128xf32, #tpu.memory_space<vmem>>, %arg4: memref<16x128xf32, #tpu.memory_space<vmem>>) attributes {dimension_semantics = [#tpu.dimension_semantics<parallel>], iteration_bounds = array<i64: 1>, scalar_prefetch = 0 : i64, scratch_operands = 0 : i64, tpu.core_type = #tpu.core_type<tc>, window_params = [{transform_indices = @transform_0, window_bounds = array<i64: 16, 128>}, {pipeline_mode = #tpu.pipeline_mode<synchronous>, transform_indices = @transform_1, window_bounds = array<i64: 128, 128>}, {pipeline_mode = #tpu.pipeline_mode<synchronous>, transform_indices = @transform_2, window_bounds = array<i64: 1, 128>}, {transform_indices = @transform_3, window_bounds = array<i64: 16, 128>}]} {
    %c0 = arith.constant 0 : index
    %c0_0 = arith.constant 0 : index
    %0 = vector.load %arg1[%c0, %c0_0] : memref<16x128xf32, #tpu.memory_space<vmem>>, vector<16x128xf32>
    %1 = arith.truncf %0 : vector<16x128xf32> to vector<16x128xbf16>
    %c0_1 = arith.constant 0 : index
    %c0_2 = arith.constant 0 : index
    %2 = vector.load %arg2[%c0_1, %c0_2] : memref<128x128xbf16, #tpu.memory_space<vmem>>, vector<128x128xbf16>
    %cst = arith.constant dense<0.000000e+00> : vector<16x128xf32>
    %3 = tpu.matmul %1, %2, %cst {dimension_numbers = #tpu.dot_dimension_numbers<[1], [0], [0], [1], [0, 0, 1, 1], [], []>} : vector<16x128xbf16>, vector<128x128xbf16>, vector<16x128xf32> -> vector<16x128xf32>
    %c0_3 = arith.constant 0 : index
    %c0_4 = arith.constant 0 : index
    %4 = vector.load %arg3[%c0_3, %c0_4] : memref<1x128xf32, #tpu.memory_space<vmem>>, vector<1x128xf32>
    %5 = vector.broadcast %4 : vector<1x128xf32> to vector<16x128xf32>
    %6 = arith.addf %3, %5 : vector<16x128xf32>
    %7 = arith.addf %6, %0 : vector<16x128xf32>
    %c0_5 = arith.constant 0 : index
    %c0_6 = arith.constant 0 : index
    %8 = vector.load %arg4[%c0_5, %c0_6] : memref<16x128xf32, #tpu.memory_space<vmem>>, vector<16x128xf32>
    tpu.vector_store %arg4[%c0_5, %c0_6], %7 {strides = array<i32>} : memref<16x128xf32, #tpu.memory_space<vmem>>, vector<16x128xf32>,
    return
  }
  func.func @transform_0(%arg0: i32) -> (i32, i32) {
    %c0_i32 = arith.constant 0 : i32
    %c0_i32_0 = arith.constant 0 : i32
    return %arg0, %c0_i32 : i32, i32
  }
  func.func @transform_1(%arg0: i32) -> (i32, i32) {
    %c0_i32 = arith.constant 0 : i32
    %c0_i32_0 = arith.constant 0 : i32
    %c0_i32_1 = arith.constant 0 : i32
    return %c0_i32, %c0_i32_0 : i32, i32
  }
  func.func @transform_2(%arg0: i32) -> (i32, i32) {
    %c0_i32 = arith.constant 0 : i32
    %c0_i32_0 = arith.constant 0 : i32
    %c0_i32_1 = arith.constant 0 : i32
    return %c0_i32, %c0_i32_0 : i32, i32
  }
  func.func @transform_3(%arg0: i32) -> (i32, i32) {
    %c0_i32 = arith.constant 0 : i32
    %c0_i32_0 = arith.constant 0 : i32
    return %arg0, %c0_i32 : i32, i32
  }
}

</mosaic_0001>

<llo_original>
// kernel: residual_linear.1
$region0: #{residual_linear.1}
  #allocation0 [shape = 'u32[]', space=smem, size = 0x4, offset = 0x4, fixed_abs, tag = 'smem constant byte address 0x4 - core index']
  #allocation1 [shape = 'u32[144,128]{1,0:T(1,128)}', space=vmem, size = 0x12000, scoped, tag = 'internal scratch']
  %s0 = inlined_call_operand.vmem [shape: f32[16,128], index: 0, kind: input, shape index: {}]
  %s1 = inlined_call_operand.vmem [shape: bf16[128,128], index: 1, kind: input, shape index: {}]
  %s2 = inlined_call_operand.vmem [shape: f32[1,128], index: 2, kind: input, shape index: {}]
  %s3 = inlined_call_operand.vmem [shape: f32[16,128], index: 3, kind: output, shape index: {}]
  %s4 = sld [smem:[#allocation0]]
  $region22: #{residual_linear.1} parent=0
    _
  %s6 = ssub.s32 1, %s4
  %s7 = scalar_select 0, %s6, %s4
  // Predicated region
  $region2: #{residual_linear.1} parent=0 // pred_check
    _
  $region3: #{residual_linear.1} parent=0 // pred_check_branch
    %9 = sbr.rel (0) target = $region5
  $region4: #{residual_linear.1} parent=0 // pred_region
    _
  $region5: #{residual_linear.1} parent=0 // pred_fallthru
    _
  // Predicated region
  $region6: #{residual_linear.1} parent=0 // pred_check
    _
  $region7: #{residual_linear.1} parent=0 // pred_check_branch
    %11 = sbr.rel (0) target = $region9
  $region8: #{residual_linear.1} parent=0 // pred_region
    _
  $region9: #{residual_linear.1} parent=0 // pred_fallthru
    _
  // Predicated region
  $region10: #{residual_linear.1} parent=0 // pred_check
    _
  $region11: #{residual_linear.1} parent=0 // pred_check_branch
    %13 = sbr.rel (0) target = $region13
  $region12: #{residual_linear.1} parent=0 // pred_region
    _
  $region13: #{residual_linear.1} parent=0 // pred_fallthru
    _
  %v15 = vld [vmem:[%s0] sm:$0xff]
  %v16 = vld [vmem:[%s0 + $0x8] sm:$0xff]
  %v17 = vpack.c.bf16 %v16, %v15
  %v18 = vld [vmem:[%s1] sm:$0xf]
  %v19 = vld [vmem:[%s1 + $0x4] sm:$0xf]
  %v20 = vld [vmem:[%s1 + $0x8] sm:$0xf]
  %v21 = vld [vmem:[%s1 + $0xc] sm:$0xf]
  %v22 = vld [vmem:[%s1 + $0x10] sm:$0xf]
  %v23 = vld [vmem:[%s1 + $0x14] sm:$0xf]
  %v24 = vld [vmem:[%s1 + $0x18] sm:$0xf]
  %v25 = vld [vmem:[%s1 + $0x1c] sm:$0xf]
  %v26 = vld [vmem:[%s1 + $0x20] sm:$0xf]
  %v27 = vld [vmem:[%s1 + $0x24] sm:$0xf]
  %v28 = vld [vmem:[%s1 + $0x28] sm:$0xf]
  %v29 = vld [vmem:[%s1 + $0x2c] sm:$0xf]
  %v30 = vld [vmem:[%s1 + $0x30] sm:$0xf]
  %v31 = vld [vmem:[%s1 + $0x34] sm:$0xf]
  %v32 = vld [vmem:[%s1 + $0x38] sm:$0xf]
  %v33 = vld [vmem:[%s1 + $0x3c] sm:$0xf]
  %v34 = vld [vmem:[%s2] sm:$0x1]
  %v36 = vlaneseq
  %v37 = vshrl.u32 %v36, 7
  %v38 = vsub.s32 0, %v37
  %v39 = vrot.slane %v34, %v38
  %v57 = vunpack.c.l.b16 %v18
  %v58 = vunpack.c.l.b16 %v19
  %v59 = vunpack.c.l.b16 %v20
  %v60 = vunpack.c.l.b16 %v21
  %v61 = vunpack.c.l.b16 %v22
  %v62 = vunpack.c.l.b16 %v23
  %v63 = vunpack.c.l.b16 %v24
  %v64 = vunpack.c.l.b16 %v25
  %v65 = vunpack.c.l.b16 %v26
  %v66 = vunpack.c.l.b16 %v27
  %v67 = vunpack.c.l.b16 %v28
  %v68 = vunpack.c.l.b16 %v29
  %v69 = vunpack.c.l.b16 %v30
  %v70 = vunpack.c.l.b16 %v31
  %v71 = vunpack.c.l.b16 %v32
  %v72 = vunpack.c.l.b16 %v33
  %v73 = vpack.c.b16 %v58, %v57
  %v74 = vpack.c.b16 %v60, %v59
  %v75 = vpack.c.b16 %v62, %v61
  %v76 = vpack.c.b16 %v64, %v63
  %v77 = vpack.c.b16 %v66, %v65
  %v78 = vpack.c.b16 %v68, %v67
  %v79 = vpack.c.b16 %v70, %v69
  %v80 = vpack.c.b16 %v72, %v71
  %89 = vmatprep.subr.bf16.mxu0 0
  %90 = vmatpush1.bf16.msra.mxu0 %v80
  %91 = vmatprep.subr.bf16.mxu0 0
  %92 = vmatpush1.bf16.msra.mxu0 %v79
  %93 = vmatprep.subr.bf16.mxu0 0
  %94 = vmatpush1.bf16.msra.mxu0 %v78
  %95 = vmatprep.subr.bf16.mxu0 0
  %96 = vmatpush1.bf16.msra.mxu0 %v77
  %97 = vmatprep.subr.bf16.mxu0 0
  %98 = vmatpush1.bf16.msra.mxu0 %v76
  %99 = vmatprep.subr.bf16.mxu0 0
  %100 = vmatpush1.bf16.msra.mxu0 %v75
  %101 = vmatprep.subr.bf16.mxu0 0
  %102 = vmatpush1.bf16.msra.mxu0 %v74
  %103 = vmatprep.subr.bf16.mxu0 0
  %104 = vmatpush1.bf16.msra.mxu0 %v73
  %105 = vmatprep.subr.bf16.mxu0 0
  %106 = vmatpush2.bf16.msra.mxu0 0
  %107 = vmatprep.subr.bf16.mxu0 0
  %108 = vmatpush2.bf16.msra.mxu0 0
  %109 = vmatprep.subr.bf16.mxu0 0
  %110 = vmatpush2.bf16.msra.mxu0 0
  %111 = vmatprep.subr.bf16.mxu0 0
  %112 = vmatpush2.bf16.msra.mxu0 0
  %113 = vmatprep.subr.bf16.mxu0 0
  %114 = vmatpush2.bf16.msra.mxu0 0
  %115 = vmatprep.subr.bf16.mxu0 0
  %116 = vmatpush2.bf16.msra.mxu0 0
  %117 = vmatprep.subr.bf16.mxu0 0
  %118 = vmatpush2.bf16.msra.mxu0 0
  %119 = vmatprep.subr.bf16.mxu0 0
  %120 = vmatpush2.bf16.msra.mxu0 0
  %121 = vmatprep.mubr.bf16.mxu0 0
  %122 = vmatmul.mubr.bf16.gmra.mxu0 %v17
  %v123 = vpop.f32.mrf.mxu0
  %v124 = vadd.f32 %v39, %v123
  %v125 = vpop.f32.mrf.mxu0
  %v126 = vpop.f32.mrf.mxu0
  %v127 = vadd.f32 %v39, %v126
  %v128 = vpop.f32.mrf.mxu0
  %129 = vdwg.mxu0
  %v130 = vadd.f32 %v124, %v15
  %v131 = vadd.f32 %v127, %v16
  %132 = vst [vmem:[%s3] sm:$0xff] %v130
  %133 = vst [vmem:[%s3 + $0x8] sm:$0xff] %v131
  // Predicated region
  $region14: #{residual_linear.1} parent=0 // pred_check
    _
  $region15: #{residual_linear.1} parent=0 // pred_check_branch
    %135 = sbr.rel (0) target = $region17
  $region16: #{residual_linear.1} parent=0 // pred_region
    _
  $region17: #{residual_linear.1} parent=0 // pred_fallthru
    _
  // Predicated region
  $region18: #{residual_linear.1} parent=0 // pred_check
    _
  $region19: #{residual_linear.1} parent=0 // pred_check_branch
    %137 = sbr.rel (0) target = $region21
  $region20: #{residual_linear.1} parent=0 // pred_region
    _
  $region21: #{residual_linear.1} parent=0 // pred_fallthru
    _

</llo_original>
